<compile_context>
chip_gen: v5e
topology: v5e:2x2
jax: 0.10.0
libtpu: 0.0.40
codegen_flags: <defaults>
</compile_context>

<pallas_src>
import functools

import jax
import jax.numpy as jnp
from jax.experimental import pallas as pl
from jax.experimental.pallas import tpu as pltpu

_LANE = 128
_SUBLANE = 8
_NEG_PAD = -1e30            # pad value for logits' class padding
_VMEM_TILE_BUDGET = 4 << 20  # bytes per logits tile buffer (x2 for double buffer)


def _round_up(x, m):
    return ((x + m - 1) // m) * m


def _focal_loss_kernel(*refs, alpha, gamma, n_valid, tile_n, has_weights):
    if has_weights:
        logits_ref, targets_ref, weights_ref, out_ref, acc_ref = refs
    else:
        logits_ref, targets_ref, out_ref, acc_ref = refs
        weights_ref = None

    i = pl.program_id(0)

    @pl.when(i == 0)
    def _init():
        acc_ref[...] = jnp.zeros_like(acc_ref)

    logits = logits_ref[...].astype(jnp.float32)       # (TILE_N, C_pad)
    tgt = targets_ref[...]                              # (TILE_N, 1) int32
    n, c = logits.shape

    # one-hot of the target class, built from an iota over the lane axis
    col = jax.lax.broadcasted_iota(jnp.int32, (n, c), 1)
    onehot = col == tgt                                  # bool (TILE_N, C_pad)

    # numerically-stable log-sum-exp
    row_max = jnp.max(logits, axis=-1, keepdims=True)    # (TILE_N, 1)
    lse = jnp.log(jnp.sum(jnp.exp(logits - row_max), axis=-1, keepdims=True)) + row_max

    # gather logits[i, t_i] via where (no multiply with the -1e30 padding)
    logit_t = jnp.sum(jnp.where(onehot, logits, 0.0), axis=-1, keepdims=True)

    # F.cross_entropy(..., reduction='none', weight=w) == w[t] * (lse - logit_t)
    ce = lse - logit_t                                   # (TILE_N, 1)
    if has_weights:
        w = weights_ref[...].astype(jnp.float32)         # (1, C_pad), pad cols = 0
        w_t = jnp.sum(jnp.where(onehot, w, 0.0), axis=-1, keepdims=True)
        ce = w_t * ce

    pt = jnp.exp(-ce)
    u = jnp.maximum(1.0 - pt, 0.0)                       # clamp against rounding

    g = float(gamma)
    if g.is_integer() and 0 <= g <= 16:
        gi = int(g)
        if gi == 0:
            mod = jnp.ones_like(u)
        else:
            mod = u
            for _ in range(gi - 1):                      # VPU multiply chain
                mod = mod * u
    else:
        mod = u ** g

    focal = mod * ce                                     # alpha folded into finalize

    # mask rows beyond the true batch size (padding rows of the last tile)
    row = jax.lax.broadcasted_iota(jnp.int32, (n, 1), 0) + i * tile_n
    focal = jnp.where(row < n_valid, focal, 0.0)

    acc_ref[...] = acc_ref[...] + jnp.sum(focal)

    @pl.when(i == pl.num_programs(0) - 1)
    def _finalize():
        # mean over the true N, scaled by alpha (both static constants)
        out_ref[...] = acc_ref[...] * (float(alpha) / float(n_valid))


def focal_loss(logits, targets, class_weights=None, *, alpha=1.0, gamma=2.0,
               tile_n=None):
    """logits: (N, C) float (f32/bf16), targets: (N,) int -> scalar float32."""
    n, c = logits.shape
    itemsize = jnp.dtype(logits.dtype).itemsize

    # lane-dense class axis: pad C up to a multiple of 128
    c_pad = max(_LANE, _round_up(c, _LANE))

    # pick a row tile: multiple of 8 sublanes, big enough to amortize grid
    # overhead, small enough to double-buffer comfortably on v7x (64 MiB VMEM).
    if tile_n is None:
        cap = (_VMEM_TILE_BUDGET // (c_pad * itemsize)) // _SUBLANE * _SUBLANE
        tile_n = max(_SUBLANE, min(1024, cap))
    else:
        tile_n = max(_SUBLANE, _round_up(int(tile_n), _SUBLANE))
    tile_n = min(tile_n, _round_up(n, _SUBLANE))
    n_pad = _round_up(n, tile_n)
    grid = (n_pad // tile_n,)

    # pad inputs (logits' class padding with a very negative value -> exp()->0;
    # padded rows are masked inside the kernel and divided out by the true N)
    logits_p = jnp.pad(logits, ((0, n_pad - n), (0, c_pad - c)),
                       constant_values=_NEG_PAD)
    targets_p = jnp.pad(targets.astype(jnp.int32), (0, n_pad - n)).reshape(n_pad, 1)

    has_weights = class_weights is not None
    in_specs = [
        pl.BlockSpec((tile_n, c_pad), lambda i: (i, 0)),
        pl.BlockSpec((tile_n, 1), lambda i: (i, 0)),
    ]
    args = [logits_p, targets_p]
    if has_weights:
        w_p = jnp.pad(class_weights.astype(jnp.float32).reshape(1, c),
                      ((0, 0), (0, c_pad - c)))
        in_specs.append(pl.BlockSpec((1, c_pad), lambda i: (0, 0)))  # resident
        args.append(w_p)

    kernel = functools.partial(
        _focal_loss_kernel,
        alpha=float(alpha), gamma=float(gamma),
        n_valid=n, tile_n=tile_n, has_weights=has_weights,
    )

    bytes_accessed = (logits_p.size * itemsize + targets_p.size * 4
                      + (c_pad * 4 if has_weights else 0) + 4)
    cost = pl.CostEstimate(
        flops=int(6 * n_pad * c_pad),
        transcendentals=int(n_pad * c_pad),
        bytes_accessed=int(bytes_accessed),
    )

    # NOTE: the row axis reduces into a single scalar accumulator, so it is
    # "arbitrary" (serial). A v7x dual-TC variant would emit per-core partial
    # sums instead; kept serial here for portability/robustness.
    out = pl.pallas_call(
        kernel,
        out_shape=jax.ShapeDtypeStruct((1, 1), jnp.float32),
        grid=grid,
        in_specs=in_specs,
        out_specs=pl.BlockSpec((1, 1), lambda i: (0, 0)),
        scratch_shapes=[pltpu.VMEM((1, 1), jnp.float32)],
        compiler_params=pltpu.CompilerParams(
            dimension_semantics=("arbitrary",),
            vmem_limit_bytes=32 * 1024 * 1024,
        ),
        cost_estimate=cost,
    )(*args)
    return out[0, 0]


def _focal_loss_ref(logits, targets, class_weights=None, alpha=1.0, gamma=2.0):
    # pure-JAX reference mirroring torch.nn.functional.cross_entropy semantics
    logp = jax.nn.log_softmax(logits.astype(jnp.float32), axis=-1)
    n = logits.shape[0]
    ce = -logp[jnp.arange(n), targets]
    if class_weights is not None:
        ce = class_weights[targets] * ce
    pt = jnp.exp(-ce)
    return jnp.mean(alpha * (1.0 - pt) ** gamma * ce)


if __name__ == "__main__":
    key = jax.random.PRNGKey(0)
    k1, k2, k3, k4 = jax.random.split(key, 4)

    # weighted case (single tile, C padded 32 -> 128)
    N, C = 16, 32
    logits = jax.random.normal(k1, (N, C), dtype=jnp.float32)
    targets = jax.random.randint(k2, (N,), 0, C, dtype=jnp.int32)
    class_weights = jnp.linspace(0.5, 1.5, C, dtype=jnp.float32)
    out = focal_loss(logits, targets, class_weights, alpha=1.0, gamma=2.0)
    out = jax.block_until_ready(out)
    ref = _focal_loss_ref(logits, targets, class_weights, 1.0, 2.0)
    assert jnp.allclose(out, ref, rtol=1e-5, atol=1e-5), (out, ref)

    # unweighted, multi-tile case (forces row padding/masking + accumulation)
    N2, C2 = 20, 10
    logits2 = jax.random.normal(k3, (N2, C2), dtype=jnp.float32)
    targets2 = jax.random.randint(k4, (N2,), 0, C2, dtype=jnp.int32)
    out2 = focal_loss(logits2, targets2, None, alpha=0.75, gamma=2.0, tile_n=8)
    out2 = jax.block_until_ready(out2)
    ref2 = _focal_loss_ref(logits2, targets2, None, 0.75, 2.0)
    assert jnp.allclose(out2, ref2, rtol=1e-5, atol=1e-5), (out2, ref2)

    print("KERNEL_OK")
</pallas_src>

<mosaic_0001>
module attributes {stable_mosaic.version = 11 : i64} {
  func.func @_focal_loss_kernel(%arg0: i32, %arg1: memref<16x128xf32, #tpu.memory_space<vmem>>, %arg2: memref<16x1xi32, #tpu.memory_space<vmem>>, %arg3: memref<1x128xf32, #tpu.memory_space<vmem>>, %arg4: memref<1x1xf32, #tpu.memory_space<vmem>>, %arg5: memref<1x1xf32, #tpu.memory_space<vmem>>) attributes {dimension_semantics = [#tpu.dimension_semantics<arbitrary>], iteration_bounds = array<i64: 1>, scalar_prefetch = 0 : i64, scratch_operands = 1 : i64, tpu.core_type = #tpu.core_type<tc>, window_params = [{transform_indices = @transform_0, window_bounds = array<i64: 16, 128>}, {transform_indices = @transform_1, window_bounds = array<i64: 16, 1>}, {pipeline_mode = #tpu.pipeline_mode<synchronous>, transform_indices = @transform_2, window_bounds = array<i64: 1, 128>}, {pipeline_mode = #tpu.pipeline_mode<synchronous>, transform_indices = @transform_3, window_bounds = array<i64: 1, 1>}]} {
    %c0_i32 = arith.constant 0 : i32
    %0 = arith.cmpi eq, %arg0, %c0_i32 : i32
    %1 = arith.extui %0 : i1 to i32
    %c0_i32_0 = arith.constant 0 : i32
    %2 = arith.cmpi ne, %1, %c0_i32_0 : i32
    scf.if %2 {
      %cst_23 = arith.constant 0.000000e+00 : f32
      %58 = vector.broadcast %cst_23 : f32 to vector<1x1xf32>
      %c0_24 = arith.constant 0 : index
      %c0_25 = arith.constant 0 : index
      %59 = vector.load %arg5[%c0_24, %c0_25] : memref<1x1xf32, #tpu.memory_space<vmem>>, vector<1x1xf32>
      tpu.vector_store %arg5[%c0_24, %c0_25], %58 {strides = array<i32>} : memref<1x1xf32, #tpu.memory_space<vmem>>, vector<1x1xf32>,
    } else {
    }
    %c0 = arith.constant 0 : index
    %c0_1 = arith.constant 0 : index
    %3 = vector.load %arg1[%c0, %c0_1] : memref<16x128xf32, #tpu.memory_space<vmem>>, vector<16x128xf32>
    %c0_2 = arith.constant 0 : index
    %c0_3 = arith.constant 0 : index
    %4 = vector.load %arg2[%c0_2, %c0_3] : memref<16x1xi32, #tpu.memory_space<vmem>>, vector<16x1xi32>
    %5 = tpu.iota {dimensions = array<i32: 1>} : vector<16x128xi32>
    %6 = vector.broadcast %4 : vector<16x1xi32> to vector<16x128xi32>
    %7 = arith.cmpi eq, %5, %6 : vector<16x128xi32>
    %cst = arith.constant dense<0xFF800000> : vector<16xf32>
    %8 = vector.multi_reduction <maximumf>, %3, %cst [1] : vector<16x128xf32> to vector<16xf32>
    %9 = vector.shape_cast %8 : vector<16xf32> to vector<16x1xf32>
    %10 = vector.broadcast %9 : vector<16x1xf32> to vector<16x128xf32>
    %11 = arith.subf %3, %10 : vector<16x128xf32>
    %12 = math.exp %11 : vector<16x128xf32>
    %cst_4 = arith.constant dense<0.000000e+00> : vector<16xf32>
    %13 = vector.multi_reduction <add>, %12, %cst_4 [1] : vector<16x128xf32> to vector<16xf32>
    %14 = vector.shape_cast %13 : vector<16xf32> to vector<16x1xf32>
    %15 = math.log %14 : vector<16x1xf32>
    %16 = arith.addf %15, %9 : vector<16x1xf32>
    %cst_5 = arith.constant 0.000000e+00 : f32
    %17 = vector.broadcast %cst_5 : f32 to vector<16x128xf32>
    %18 = arith.select %7, %3, %17 : vector<16x128xi1>, vector<16x128xf32>
    %cst_6 = arith.constant dense<0.000000e+00> : vector<16xf32>
    %19 = vector.multi_reduction <add>, %18, %cst_6 [1] : vector<16x128xf32> to vector<16xf32>
    %20 = vector.shape_cast %19 : vector<16xf32> to vector<16x1xf32>
    %21 = arith.subf %16, %20 : vector<16x1xf32>
    %c0_7 = arith.constant 0 : index
    %c0_8 = arith.constant 0 : index
    %22 = vector.load %arg3[%c0_7, %c0_8] : memref<1x128xf32, #tpu.memory_space<vmem>>, vector<1x128xf32>
    %cst_9 = arith.constant 0.000000e+00 : f32
    %23 = vector.shape_cast %22 : vector<1x128xf32> to vector<1x128xf32>
    %24 = vector.broadcast %23 : vector<1x128xf32> to vector<16x128xf32>
    %25 = vector.broadcast %cst_9 : f32 to vector<16x128xf32>
    %26 = arith.select %7, %24, %25 : vector<16x128xi1>, vector<16x128xf32>
    %cst_10 = arith.constant dense<0.000000e+00> : vector<16xf32>
    %27 = vector.multi_reduction <add>, %26, %cst_10 [1] : vector<16x128xf32> to vector<16xf32>
    %28 = vector.shape_cast %27 : vector<16xf32> to vector<16x1xf32>
    %29 = arith.mulf %28, %21 : vector<16x1xf32>
    %cst_11 = arith.constant 0.000000e+00 : f32
    %30 = vector.broadcast %cst_11 : f32 to vector<16x1xf32>
    %31 = arith.subf %30, %29 : vector<16x1xf32>
    %32 = math.exp %31 : vector<16x1xf32>
    %cst_12 = arith.constant 1.000000e+00 : f32
    %33 = vector.broadcast %cst_12 : f32 to vector<16x1xf32>
    %34 = arith.subf %33, %32 : vector<16x1xf32>
    %cst_13 = arith.constant 0.000000e+00 : f32
    %35 = vector.broadcast %cst_13 : f32 to vector<16x1xf32>
    %36 = arith.maximumf %34, %35 : vector<16x1xf32>
    %37 = arith.mulf %36, %36 : vector<16x1xf32>
    %38 = arith.mulf %37, %29 : vector<16x1xf32>
    %39 = tpu.iota {dimensions = array<i32: 0>} : vector<16x1xi32>
    %c16_i32 = arith.constant 16 : i32
    %40 = arith.muli %arg0, %c16_i32 : i32
    %41 = vector.broadcast %40 : i32 to vector<16x1xi32>
    %42 = arith.addi %39, %41 : vector<16x1xi32>
    %c16_i32_14 = arith.constant 16 : i32
    %43 = vector.broadcast %c16_i32_14 : i32 to vector<16x1xi32>
    %44 = arith.cmpi slt, %42, %43 : vector<16x1xi32>
    %cst_15 = arith.constant 0.000000e+00 : f32
    %45 = vector.broadcast %cst_15 : f32 to vector<16x1xf32>
    %46 = arith.select %44, %38, %45 : vector<16x1xi1>, vector<16x1xf32>
    %c0_16 = arith.constant 0 : index
    %c0_17 = arith.constant 0 : index
    %47 = vector.load %arg5[%c0_16, %c0_17] : memref<1x1xf32, #tpu.memory_space<vmem>>, vector<1x1xf32>
    %48 = vector.shape_cast %46 : vector<16x1xf32> to vector<1x16x1xf32>
    %cst_18 = arith.constant dense<0.000000e+00> : vector<1xf32>
    %49 = vector.multi_reduction <add>, %48, %cst_18 [1, 2] : vector<1x16x1xf32> to vector<1xf32>
    %50 = vector.shape_cast %49 : vector<1xf32> to vector<1x1x1xf32>
    %51 = vector.extract %50[0, 0, 0] : f32 from vector<1x1x1xf32>
    %52 = vector.broadcast %51 : f32 to vector<1x1xf32>
    %53 = arith.addf %47, %52 : vector<1x1xf32>
    %c0_19 = arith.constant 0 : index
    %c0_20 = arith.constant 0 : index
    %54 = vector.load %arg5[%c0_19, %c0_20] : memref<1x1xf32, #tpu.memory_space<vmem>>, vector<1x1xf32>
    tpu.vector_store %arg5[%c0_19, %c0_20], %53 {strides = array<i32>} : memref<1x1xf32, #tpu.memory_space<vmem>>, vector<1x1xf32>,
    %c0_i32_21 = arith.constant 0 : i32
    %55 = arith.cmpi eq, %arg0, %c0_i32_21 : i32
    %56 = arith.extui %55 : i1 to i32
    %c0_i32_22 = arith.constant 0 : i32
    %57 = arith.cmpi ne, %56, %c0_i32_22 : i32
    scf.if %57 {
      %c0_23 = arith.constant 0 : index
      %c0_24 = arith.constant 0 : index
      %58 = vector.load %arg5[%c0_23, %c0_24] : memref<1x1xf32, #tpu.memory_space<vmem>>, vector<1x1xf32>
      %cst_25 = arith.constant 6.250000e-02 : f32
      %59 = vector.broadcast %cst_25 : f32 to vector<1x1xf32>
      %60 = arith.mulf %58, %59 : vector<1x1xf32>
      %c0_26 = arith.constant 0 : index
      %c0_27 = arith.constant 0 : index
      %61 = vector.load %arg4[%c0_26, %c0_27] : memref<1x1xf32, #tpu.memory_space<vmem>>, vector<1x1xf32>
      tpu.vector_store %arg4[%c0_26, %c0_27], %60 {strides = array<i32>} : memref<1x1xf32, #tpu.memory_space<vmem>>, vector<1x1xf32>,
    } else {
    }
    return
  }
  func.func @transform_0(%arg0: i32) -> (i32, i32) {
    %c0_i32 = arith.constant 0 : i32
    %c0_i32_0 = arith.constant 0 : i32
    return %arg0, %c0_i32 : i32, i32
  }
  func.func @transform_1(%arg0: i32) -> (i32, i32) {
    %c0_i32 = arith.constant 0 : i32
    %c0_i32_0 = arith.constant 0 : i32
    return %arg0, %c0_i32 : i32, i32
  }
  func.func @transform_2(%arg0: i32) -> (i32, i32) {
    %c0_i32 = arith.constant 0 : i32
    %c0_i32_0 = arith.constant 0 : i32
    %c0_i32_1 = arith.constant 0 : i32
    return %c0_i32, %c0_i32_0 : i32, i32
  }
  func.func @transform_3(%arg0: i32) -> (i32, i32) {
    %c0_i32 = arith.constant 0 : i32
    %c0_i32_0 = arith.constant 0 : i32
    %c0_i32_1 = arith.constant 0 : i32
    return %c0_i32, %c0_i32_0 : i32, i32
  }
}

</mosaic_0001>

<llo_original>
// kernel: tpu_custom_call.1
$region0: #{tpu_custom_call.1}
  #allocation0 [shape = 'u32[]', space=smem, size = 0x4, offset = 0x4, fixed_abs, tag = 'smem constant byte address 0x4 - core index']
  #allocation1 [shape = 'u32[72,128]{1,0:T(1,128)}', space=vmem, size = 0x9000, scoped, tag = 'internal scratch']
  #allocation2 [shape = 'f32[1,1]{1,0:T(1,128)}', space=vmem, size = 0x200, scoped, tag = 'scratch operand']
  %s0 = inlined_call_operand.vmem [shape: f32[16,128], index: 0, kind: input, shape index: {}]
  %s1 = inlined_call_operand.vmem [shape: s32[16,1], index: 1, kind: input, shape index: {}]
  %s2 = inlined_call_operand.vmem [shape: f32[1,128], index: 2, kind: input, shape index: {}]
  %s3 = inlined_call_operand.hbm [shape: f32[1,1], index: 3, kind: output, shape index: {}]
  %s4 = sld [smem:[#allocation0]]
  $region30: #{tpu_custom_call.1} parent=0
    _
  %s6 = ssub.s32 1, %s4
  %s7 = scalar_select 0, %s6, %s4
  $region1: #{tpu_custom_call.1} parent=0
    #allocation3 [shape = 'u8[512]{0}', space=vmem, size = 0x400, scoped, tag = 'output window, operand 0, single buffered']
    #allocation4 [shape = 's32[1]{0}', space=sflag, size = 0x4, scoped, tag = 'scoped memory for tpu_custom_call.1']
    %8 = vsyncpa [#allocation4], 0
    // Predicated region
    $region2: #{tpu_custom_call.1} parent=1 // pred_check
      _
    $region3: #{tpu_custom_call.1} parent=1 // pred_check_branch
      %10 = sbr.rel (0) target = $region5
    $region4: #{tpu_custom_call.1} parent=1 // pred_region
      _
    $region5: #{tpu_custom_call.1} parent=1 // pred_fallthru
      _
    // Predicated region
    $region6: #{tpu_custom_call.1} parent=1 // pred_check
      _
    $region7: #{tpu_custom_call.1} parent=1 // pred_check_branch
      %12 = sbr.rel (0) target = $region9
    $region8: #{tpu_custom_call.1} parent=1 // pred_region
      _
    $region9: #{tpu_custom_call.1} parent=1 // pred_fallthru
      _
    // Predicated region
    $region10: #{tpu_custom_call.1} parent=1 // pred_check
      _
    $region11: #{tpu_custom_call.1} parent=1 // pred_check_branch
      %14 = sbr.rel (0) target = $region13
    $region12: #{tpu_custom_call.1} parent=1 // pred_region
      _
    $region13: #{tpu_custom_call.1} parent=1 // pred_fallthru
      _
    %p15 = scmp.eq.s32.totalorder 0, 0
    // Predicated region
    $region14: #{tpu_custom_call.1} parent=1 // pred_check
      %p16 = pneg %p15
    $region15: #{tpu_custom_call.1} parent=1 // pred_check_branch
      %18 = sbr.rel (%p16) target = $region17
    $region16: #{tpu_custom_call.1} parent=1 // pred_region
      %vm19 = vcmask 0
      %20 = vst.msk [vmem:[#allocation2] sm:$0x1] %vm19, 0.0
    $region17: #{tpu_custom_call.1} parent=1 // pred_fallthru
      _
    %v21 = vld [vmem:[%s0] sm:$0xff]
    %v22 = vld [vmem:[%s0 + $0x8] sm:$0xff]
    %v23 = vld [vmem:[%s1] sm:$0xff]
    %v24 = vld [vmem:[%s1 + $0x8] sm:$0xff]
    %v25 = vlaneseq
    %v26 = vand.u32 %v25, 127
    %27 = vset.pattern.permute.xlu0 0
    %28 = vperm.xlu0 %27, %v23
    %v29 = vpop.permute.xlu0 %28
    %30 = vset.pattern.permute.xlu0 0
    %31 = vperm.xlu0 %30, %v24
    %v32 = vpop.permute.xlu0 %31
    %vm33 = vcmp.eq.s32.totalorder %v26, %v29
    %vm34 = vcmp.eq.s32.totalorder %v26, %v32
    %35 = vmax.xlane.f32.xlu0 %v21
    %v36 = vpop.xlane.xlu0 %35
    %37 = vmax.xlane.f32.xlu0 %v22
    %v38 = vpop.xlane.xlu0 %37
    %v39 = vsub.f32 %v21, %v36
    %v40 = vsub.f32 %v22, %v38
    %v41 = vmul.f32 %v39, 1.442695
    %v42 = vpow.pop %v41
    %v43 = vmul.f32 %v40, 1.442695
    %v44 = vpow.pop %v43
    %45 = vadd.xlane.f32.xlu0 %v42
    %v46 = vpop.xlane.xlu0 %45
    %47 = vadd.xlane.f32.xlu0 %v44
    %v48 = vpop.xlane.xlu0 %47
    %v49 = vlog2.pop %v46
    %v50 = vmul.f32 %v49, 0.6931472
    %v51 = vlog2.pop %v48
    %v52 = vmul.f32 %v51, 0.6931472
    %v53 = vadd.f32 %v50, %v36
    %v54 = vadd.f32 %v52, %v38
    %v55 = vsel %vm33, %v21, 0.0
    %v56 = vsel %vm34, %v22, 0.0
    %57 = vadd.xlane.f32.xlu0 %v55
    %v58 = vpop.xlane.xlu0 %57
    %59 = vadd.xlane.f32.xlu0 %v56
    %v60 = vpop.xlane.xlu0 %59
    %v61 = vsub.f32 %v53, %v58
    %v62 = vsub.f32 %v54, %v60
    %v63 = vld [vmem:[%s2] sm:$0x1]
    %v65 = vperm.slane %v63, 0
    %v67 = vsel %vm33, %v65, 0.0
    %v68 = vsel %vm34, %v65, 0.0
    %69 = vadd.xlane.f32.xlu0 %v67
    %v70 = vpop.xlane.xlu0 %69
    %71 = vadd.xlane.f32.xlu0 %v68
    %v72 = vpop.xlane.xlu0 %71
    %v73 = vmul.f32 %v70, %v61
    %v74 = vmul.f32 %v72, %v62
    %v75 = vsub.f32 0.0, %v73
    %v76 = vsub.f32 0.0, %v74
    %v77 = vmul.f32 %v75, 1.442695
    %v78 = vpow.pop %v77
    %v79 = vmul.f32 %v76, 1.442695
    %v80 = vpow.pop %v79
    %v81 = vsub.f32 1.0, %v78
    %v82 = vsub.f32 1.0, %v80
    %v83 = vmax.f32 %v81, 0.0
    %v84 = vmax.f32 %v82, 0.0
    %v85 = vmul.f32 %v83, %v83
    %v86 = vmul.f32 %v84, %v84
    %v87 = vmul.f32 %v85, %v73
    %v88 = vmul.f32 %v86, %v74
    %v89 = vlaneseq
    %v90 = vshrl.u32 %v89, 7
    %v91 = vadd.s32 %v90, 8
    %s92 = smul.u32 0, 16
    %v93 = vstv %s92
    %v94 = vadd.s32 %v90, %v93
    %v95 = vadd.s32 %v91, %v93
    %vm96 = vcmp.lt.s32.totalorder %v94, 16
    %vm97 = vcmp.lt.s32.totalorder %v95, 16
    %v98 = vsel %vm96, %v87, 0.0
    %v99 = vsel %vm97, %v88, 0.0
    %v100 = vld [vmem:[#allocation2] sm:$0x1]
    %vm101 = vcmask 7168
    %v102 = vsel %vm101, %v98, 0.0
    %v103 = vsel %vm101, %v99, 0.0
    %v104 = vadd.f32 %v102, %v103
    %105 = vadd.xlane.f32.xlu0 %v104
    %v106 = vpop.xlane.xlu0 %105
    %v107 = vrot.slane %v106, 4
    %v108 = vadd.f32 %v106, %v107
    %v109 = vrot.slane %v108, 2
    %v110 = vadd.f32 %v108, %v109
    %v111 = vrot.slane %v110, 1
    %v112 = vadd.f32 %v110, %v111
    %s113 = vtos %v112
    %v114 = vstv %s113
    %v115 = vadd.f32 %v100, %v114
    %vm116 = vcmask 0
    %117 = vst.msk [vmem:[#allocation2] sm:$0x1] %vm116, %v115
    // Predicated region
    $region18: #{tpu_custom_call.1} parent=1 // pred_check
      %p118 = pneg %p15
    $region19: #{tpu_custom_call.1} parent=1 // pred_check_branch
      %120 = sbr.rel (%p118) target = $region21
    $region20: #{tpu_custom_call.1} parent=1 // pred_region
      %v121 = vld [vmem:[#allocation2] sm:$0x1]
      %v122 = vmul.f32 %v121, 0.0625
      %123 = vst.msk [vmem:[#allocation3] sm:$0x1] %vm116, %v122
    $region21: #{tpu_custom_call.1} parent=1 // pred_fallthru
      _
    // Predicated region
    $region22: #{tpu_custom_call.1} parent=1 // pred_check
      _
    $region23: #{tpu_custom_call.1} parent=1 // pred_check_branch
      %125 = sbr.rel (0) target = $region25
    $region24: #{tpu_custom_call.1} parent=1 // pred_region
      %127 = vsyncadd [#allocation4], 0
      %s129 = sshll.u32 [#allocation3], 4
      %s130 = int_to_ptr.vmem [resolvable:$true] %s129
      %s131 = sshll.u32 %s3, 4
      %s132 = int_to_ptr.hbm [resolvable:$true] %s131
      %134 = dma.vmem_to_hbm [thread:$0]  %s130, 16, %s132, [#allocation4]
    $region25: #{tpu_custom_call.1} parent=1 // pred_fallthru
      _
    // Predicated region
    $region26: #{tpu_custom_call.1} parent=1 // pred_check
      _
    $region27: #{tpu_custom_call.1} parent=1 // pred_check_branch
      %136 = sbr.rel (0) target = $region29
    $region28: #{tpu_custom_call.1} parent=1 // pred_region
      %138 = dma.done [#allocation4], 16
    $region29: #{tpu_custom_call.1} parent=1 // pred_fallthru
      _
    %139 = vsyncpa [#allocation4], 1

</llo_original>
